<compile_context>
chip_gen: v7x
topology: tpu7x:2x2x1
jax: 0.10.0
libtpu: 0.0.40
codegen_flags: <defaults>
</compile_context>

<pallas_src>
import functools

import jax
import jax.numpy as jnp
from jax import lax
from jax.experimental import pallas as pl
from jax.experimental.pallas import tpu as pltpu

NUM_CLASS = 10       # num_class (synthetic choice)
NUM_EPOCHS = 100     # fixed in the module (nn.Embedding(100, ...))
LABEL_EMB = 2        # label_embedding_size
EPOCH_EMB = 5        # epoch_embedding_size
NUM_FC = 20          # num_fc_nodes
FEAT_DIM = LABEL_EMB + EPOCH_EMB + 4   # = 11, matches nn.Linear(11, 20)

_MAX_TB = 16 * 1024  # f32 [128, TB] indicator is 8 MiB at this cap -> ~11 MiB live


def _round_up(x, m):
    return (x + m - 1) // m * m


def _choose_tile(batch, block_b):
    """Lane-dense batch tile: as large as VMEM allows, >=2 steps when big."""
    b128 = _round_up(batch, 128)
    cap = max(128, min(_round_up(block_b, 128), _MAX_TB))
    steps = pl.cdiv(b128, cap)
    if steps < 2 and b128 >= 512:
        steps = 2           # give the second v7x TensorCore real work
    return _round_up(pl.cdiv(b128, steps), 128)


def mentornet_kernel(x_ref,            # VMEM [4, TB] f32: loss | loss_diff | label(bits) | epoch(bits)
                     w_lstm_ref,       # SMEM (16,) f32: [fw i0,i1,f0,f1,g0,g1,o0,o1 | bw ...]
                     a_ref,            # VMEM [20, FUSED] fused fc1 table (embeddings + lstm cols + bias col)
                     fc2_w_ref,        # VMEM [1, 20]
                     fc2_b_ref,        # VMEM [1, 1]
                     out_ref,          # VMEM [1, TB]
                     ind_ref,          # VMEM scratch [FUSED, TB] f32 indicator
                     *, num_class):
    f32 = jnp.float32
    fused, tb = ind_ref.shape
    feat_row = fused - 8             # sublane-aligned row group for the LSTM feats

    x = x_ref[...]                                    # [4, TB] f32 (single DMA)
    loss = x[0:1, :]
    ldiff = x[1:2, :]
    label = pltpu.bitcast(x[2:3, :], jnp.int32)       # transported as raw bits
    epoch = pltpu.bitcast(x[3:4, :], jnp.int32)

    # ---- bidirectional LSTM, seq_len=1, hidden=1, no bias, h0=c0=0 ----
    # Pure VPU/EUP scalar-broadcast FMAs (PyTorch gate order i,f,g,o; the
    # f-gate is dead because c0 = 0).
    def lstm_dir(base):
        i = jax.nn.sigmoid(w_lstm_ref[base + 0] * loss + w_lstm_ref[base + 1] * ldiff)
        g = jnp.tanh(w_lstm_ref[base + 4] * loss + w_lstm_ref[base + 5] * ldiff)
        o = jax.nn.sigmoid(w_lstm_ref[base + 6] * loss + w_lstm_ref[base + 7] * ldiff)
        c = i * g                      # f * c0 == 0
        h = o * jnp.tanh(c)
        return h, c                    # [1, TB] each

    h_fw, c_fw = lstm_dir(0)
    h_bw, c_bw = lstm_dir(8)

    # ---- joint one-hot indicator: label row + (num_class+epoch) row hot ----
    # Streamed straight into the VMEM scratch (explicit residency instead of a
    # compiler-spilled temporary).
    sub = lax.broadcasted_iota(jnp.int32, (fused, tb), 0)
    hot = (sub == label) | (sub == (epoch + num_class))
    ind_ref[...] = hot.astype(f32)

    # Spare padded rows carry the LSTM features and a constant-1 bias row, so
    # the single MXU matmul below computes ALL of fc1 (embeddings, LSTM part,
    # bias).  Rows feat_row+5 .. fused-1 remain 0 from the store above.
    ind_ref[feat_row + 0:feat_row + 1, :] = h_fw
    ind_ref[feat_row + 1:feat_row + 2, :] = h_bw
    ind_ref[feat_row + 2:feat_row + 3, :] = c_fw
    ind_ref[feat_row + 3:feat_row + 4, :] = c_bw
    ind_ref[feat_row + 4:feat_row + 5, :] = jnp.ones_like(loss)

    # fc1 (fused, incl. bias) -> tanh -> fc2 -> sigmoid, lane-dense [1, TB] out.
    # Assumption: Mosaic's f32 matmul multipass keeps error well under 1e-4
    # (one-hot rows are exact in any bf16 split; feature/bias terms are tiny).
    z = jnp.dot(a_ref[...], ind_ref[...], preferred_element_type=f32)   # [20, TB]
    t = jnp.tanh(z)
    out = jnp.dot(fc2_w_ref[...], t, preferred_element_type=f32) + fc2_b_ref[...]
    out_ref[...] = jax.nn.sigmoid(out)


def mentornet_forward(loss, loss_diff, label, epoch, params, *, block_b=16384):
    """input_features == (loss[B], loss_diff[B], label[B] int, epoch[B] int)."""
    hi = jax.lax.Precision.HIGHEST
    B = loss.shape[0]
    num_class, label_dim = params["label_table"].shape
    num_epochs, epoch_dim = params["epoch_table"].shape
    num_fc = params["fc1_w"].shape[0]

    fused = max(128, _round_up(num_class + num_epochs + 8, 128))   # 10+100 -> 128
    feat_row = fused - 8

    tb = _choose_tile(B, block_b)
    padded_b = _round_up(B, tb)
    grid = (padded_b // tb,)

    # One packed [4, padded_B] f32 input slab: loss, loss_diff and the two int
    # features bitcast to f32 for transport (single DMA per grid step).
    x = jnp.stack([
        loss.astype(jnp.float32),
        loss_diff.astype(jnp.float32),
        lax.bitcast_convert_type(label.astype(jnp.int32), jnp.float32),
        lax.bitcast_convert_type(epoch.astype(jnp.int32), jnp.float32),
    ], axis=0)
    if padded_b > B:
        # Zero padding -> label=0 / epoch=0 bit patterns; padded columns produce
        # garbage outputs that are sliced off below (never consumed).
        x = jnp.pad(x, ((0, 0), (0, padded_b - B)))

    # LSTM input weights flattened for SMEM scalar reads.
    w_lstm = jnp.concatenate(
        [params["w_ih_fw"].reshape(-1), params["w_ih_bw"].reshape(-1)]
    ).astype(jnp.float32)                                             # (16,)

    # Fold the embedding tables, the LSTM-feature columns of fc1 AND fc1_b into
    # one fused [num_fc, fused] table (done once, outside the kernel):
    #   cols [0, C)          : fc1_w[:, :2]  @ label_table.T
    #   cols [C, C+100)      : fc1_w[:, 2:7] @ epoch_table.T
    #   cols feat_row+0..3   : fc1_w[:, 7:11]   (h_fw, h_bw, c_fw, c_bw)
    #   col  feat_row+4      : fc1_b            (paired with a constant-1 row)
    fc1_w = params["fc1_w"].astype(jnp.float32)                       # [20, 11]
    lt = params["label_table"].astype(jnp.float32)                    # [C, 2]
    et = params["epoch_table"].astype(jnp.float32)                    # [100, 5]
    a_label = jnp.einsum("nj,cj->nc", fc1_w[:, :label_dim], lt, precision=hi)
    a_epoch = jnp.einsum("nj,ej->ne",
                         fc1_w[:, label_dim:label_dim + epoch_dim], et, precision=hi)
    a_fused = jnp.zeros((num_fc, fused), jnp.float32)
    a_fused = a_fused.at[:, :num_class].set(a_label)
    a_fused = a_fused.at[:, num_class:num_class + num_epochs].set(a_epoch)
    a_fused = a_fused.at[:, feat_row:feat_row + 4].set(fc1_w[:, label_dim + epoch_dim:])
    a_fused = a_fused.at[:, feat_row + 4].set(params["fc1_b"].astype(jnp.float32))

    fc2_w = params["fc2_w"].reshape(1, num_fc).astype(jnp.float32)
    fc2_b = params["fc2_b"].reshape(1, 1).astype(jnp.float32)

    def const_spec(arr):
        # Full-array block, constant index map -> fetched once, VMEM-resident.
        return pl.BlockSpec(arr.shape, lambda i: (0, 0))

    out = pl.pallas_call(
        functools.partial(mentornet_kernel, num_class=num_class),
        out_shape=jax.ShapeDtypeStruct((1, padded_b), jnp.float32),
        grid=grid,
        in_specs=[
            pl.BlockSpec((4, tb), lambda i: (0, i)),                    # packed inputs
            pl.BlockSpec(memory_space=pltpu.MemorySpace.SMEM),          # lstm weights
            const_spec(a_fused), const_spec(fc2_w), const_spec(fc2_b),
        ],
        out_specs=pl.BlockSpec((1, tb), lambda i: (0, i)),
        scratch_shapes=[pltpu.VMEM((fused, tb), jnp.float32)],
        compiler_params=pltpu.CompilerParams(
            dimension_semantics=("parallel",),
            vmem_limit_bytes=32 * 1024 * 1024),
    )(x, w_lstm, a_fused, fc2_w, fc2_b)

    return out[0, :B].reshape(B, 1)


def mentornet_ref(loss, loss_diff, label, epoch, p):
    """Pure-JAX reference mirroring the PyTorch forward exactly."""
    hi = jax.lax.Precision.HIGHEST
    label_emb = p["label_table"][label]
    epoch_emb = p["epoch_table"][epoch]
    x = jnp.stack([loss, loss_diff], axis=1)

    def step(w_ih):
        g = jnp.dot(x, w_ih.T, precision=hi)
        i = jax.nn.sigmoid(g[:, 0:1])
        gg = jnp.tanh(g[:, 2:3])
        o = jax.nn.sigmoid(g[:, 3:4])
        c = i * gg
        h = o * jnp.tanh(c)
        return h, c

    h_fw, c_fw = step(p["w_ih_fw"])
    h_bw, c_bw = step(p["w_ih_bw"])
    feat = jnp.concatenate([label_emb, epoch_emb, h_fw, h_bw, c_fw, c_bw], axis=1)
    z = jnp.tanh(jnp.dot(feat, p["fc1_w"].T, precision=hi) + p["fc1_b"])
    z = jnp.dot(z, p["fc2_w"].T, precision=hi) + p["fc2_b"]
    return jax.nn.sigmoid(z)


if __name__ == "__main__":
    key = jax.random.PRNGKey(0)
    ks = jax.random.split(key, 8)

    # Deterministic parameter initialization (shapes per mentorNet.__init__).
    params = {
        "label_table": jax.random.normal(ks[0], (NUM_CLASS, LABEL_EMB), jnp.float32),
        "epoch_table": jax.random.normal(ks[1], (NUM_EPOCHS, EPOCH_EMB), jnp.float32),
        "w_ih_fw": 0.5 * jax.random.normal(ks[2], (4, 2), jnp.float32),   # weight_ih_l0
        "w_ih_bw": 0.5 * jax.random.normal(ks[3], (4, 2), jnp.float32),   # weight_ih_l0_reverse
        "fc1_w": 0.3 * jax.random.normal(ks[4], (NUM_FC, FEAT_DIM), jnp.float32),
        "fc1_b": 0.1 * jax.random.normal(ks[5], (NUM_FC,), jnp.float32),
        "fc2_w": 0.3 * jax.random.normal(ks[6], (1, NUM_FC), jnp.float32),
        "fc2_b": 0.1 * jax.random.normal(ks[7], (1,), jnp.float32),
    }
    # Note: weight_hh_l0 / weight_hh_l0_reverse exist in the module but never
    # contribute here (seq_len=1, zero initial state).

    # Three cases: tiny (single step), padded multi-step small tile, and a
    # larger batch that exercises the packed-input / fused-matmul path with a
    # multi-step parallel grid (megacore-friendly split, modest compile time).
    for B, block_b in ((8, 16384), (300, 128), (5000, 4096)):
        kb = jax.random.fold_in(key, B)
        k1, k2, k3, k4 = jax.random.split(kb, 4)
        loss = jax.random.normal(k1, (B,), jnp.float32)
        loss_diff = 0.1 * jax.random.normal(k2, (B,), jnp.float32)
        label = jax.random.randint(k3, (B,), 0, NUM_CLASS, jnp.int32)
        epoch = jax.random.randint(k4, (B,), 0, NUM_EPOCHS, jnp.int32)

        out = jax.block_until_ready(
            mentornet_forward(loss, loss_diff, label, epoch, params, block_b=block_b))
        ref = mentornet_ref(loss, loss_diff, label, epoch, params)

        assert out.shape == (B, 1)
        assert bool(jnp.all(jnp.isfinite(out)))
        # 1e-4 tolerance covers the f32 MXU multipass accumulation of the now
        # matmul-fused LSTM-feature / bias terms (f32 weights throughout).
        assert bool(jnp.allclose(out, ref, atol=1e-4, rtol=1e-4)), (
            B, float(jnp.max(jnp.abs(out - ref))))

    print("KERNEL_OK")
</pallas_src>

<mosaic_0001>
module attributes {stable_mosaic.version = 11 : i64} {
  func.func @mentornet_kernel(%arg0: i32, %arg1: memref<4x128xf32, #tpu.memory_space<vmem>>, %arg2: memref<16xf32, #tpu.memory_space<smem>>, %arg3: memref<20x128xf32, #tpu.memory_space<vmem>>, %arg4: memref<1x20xf32, #tpu.memory_space<vmem>>, %arg5: memref<1x1xf32, #tpu.memory_space<vmem>>, %arg6: memref<1x128xf32, #tpu.memory_space<vmem>>, %arg7: memref<128x128xf32, #tpu.memory_space<vmem>>) attributes {dimension_semantics = [#tpu.dimension_semantics<parallel>], iteration_bounds = array<i64: 1>, scalar_prefetch = 0 : i64, scratch_operands = 1 : i64, tpu.core_type = #tpu.core_type<tc>, window_params = [{transform_indices = @transform_0, window_bounds = array<i64: 4, 128>}, {transform_indices = @transform_1, window_bounds = array<i64: 16>}, {pipeline_mode = #tpu.pipeline_mode<synchronous>, transform_indices = @transform_2, window_bounds = array<i64: 20, 128>}, {pipeline_mode = #tpu.pipeline_mode<synchronous>, transform_indices = @transform_3, window_bounds = array<i64: 1, 20>}, {pipeline_mode = #tpu.pipeline_mode<synchronous>, transform_indices = @transform_4, window_bounds = array<i64: 1, 1>}, {transform_indices = @transform_5, window_bounds = array<i64: 1, 128>}]} {
    %c0 = arith.constant 0 : index
    %c0_0 = arith.constant 0 : index
    %0 = vector.load %arg1[%c0, %c0_0] : memref<4x128xf32, #tpu.memory_space<vmem>>, vector<4x128xf32>
    %1 = vector.extract_strided_slice %0 {offsets = [0, 0], sizes = [1, 128], strides = [1, 1]} : vector<4x128xf32> to vector<1x128xf32>
    %2 = vector.extract_strided_slice %0 {offsets = [1, 0], sizes = [1, 128], strides = [1, 1]} : vector<4x128xf32> to vector<1x128xf32>
    %3 = vector.extract_strided_slice %0 {offsets = [2, 0], sizes = [1, 128], strides = [1, 1]} : vector<4x128xf32> to vector<1x128xf32>
    %4 = tpu.bitcast %3 : vector<1x128xf32> -> vector<1x128xi32>
    %5 = vector.extract_strided_slice %0 {offsets = [3, 0], sizes = [1, 128], strides = [1, 1]} : vector<4x128xf32> to vector<1x128xf32>
    %6 = tpu.bitcast %5 : vector<1x128xf32> -> vector<1x128xi32>
    %c0_1 = arith.constant 0 : index
    %7 = memref.load %arg2[%c0_1] : memref<16xf32, #tpu.memory_space<smem>>
    %8 = vector.broadcast %7 : f32 to vector<1x128xf32>
    %9 = arith.mulf %8, %1 : vector<1x128xf32>
    %c1 = arith.constant 1 : index
    %10 = memref.load %arg2[%c1] : memref<16xf32, #tpu.memory_space<smem>>
    %11 = vector.broadcast %10 : f32 to vector<1x128xf32>
    %12 = arith.mulf %11, %2 : vector<1x128xf32>
    %13 = arith.addf %9, %12 : vector<1x128xf32>
    %14 = arith.negf %13 : vector<1x128xf32>
    %15 = math.exp %14 : vector<1x128xf32>
    %cst = arith.constant 1.000000e+00 : f32
    %16 = vector.broadcast %cst : f32 to vector<1x128xf32>
    %17 = arith.addf %16, %15 : vector<1x128xf32>
    %18 = arith.divf %16, %17 : vector<1x128xf32>
    %c4 = arith.constant 4 : index
    %19 = memref.load %arg2[%c4] : memref<16xf32, #tpu.memory_space<smem>>
    %20 = vector.broadcast %19 : f32 to vector<1x128xf32>
    %21 = arith.mulf %20, %1 : vector<1x128xf32>
    %c5 = arith.constant 5 : index
    %22 = memref.load %arg2[%c5] : memref<16xf32, #tpu.memory_space<smem>>
    %23 = vector.broadcast %22 : f32 to vector<1x128xf32>
    %24 = arith.mulf %23, %2 : vector<1x128xf32>
    %25 = arith.addf %21, %24 : vector<1x128xf32>
    %26 = math.tanh %25 : vector<1x128xf32>
    %c6 = arith.constant 6 : index
    %27 = memref.load %arg2[%c6] : memref<16xf32, #tpu.memory_space<smem>>
    %28 = vector.broadcast %27 : f32 to vector<1x128xf32>
    %29 = arith.mulf %28, %1 : vector<1x128xf32>
    %c7 = arith.constant 7 : index
    %30 = memref.load %arg2[%c7] : memref<16xf32, #tpu.memory_space<smem>>
    %31 = vector.broadcast %30 : f32 to vector<1x128xf32>
    %32 = arith.mulf %31, %2 : vector<1x128xf32>
    %33 = arith.addf %29, %32 : vector<1x128xf32>
    %34 = arith.negf %33 : vector<1x128xf32>
    %35 = math.exp %34 : vector<1x128xf32>
    %cst_2 = arith.constant 1.000000e+00 : f32
    %36 = vector.broadcast %cst_2 : f32 to vector<1x128xf32>
    %37 = arith.addf %36, %35 : vector<1x128xf32>
    %38 = arith.divf %36, %37 : vector<1x128xf32>
    %39 = arith.mulf %18, %26 : vector<1x128xf32>
    %40 = math.tanh %39 : vector<1x128xf32>
    %41 = arith.mulf %38, %40 : vector<1x128xf32>
    %c8 = arith.constant 8 : index
    %42 = memref.load %arg2[%c8] : memref<16xf32, #tpu.memory_space<smem>>
    %43 = vector.broadcast %42 : f32 to vector<1x128xf32>
    %44 = arith.mulf %43, %1 : vector<1x128xf32>
    %c9 = arith.constant 9 : index
    %45 = memref.load %arg2[%c9] : memref<16xf32, #tpu.memory_space<smem>>
    %46 = vector.broadcast %45 : f32 to vector<1x128xf32>
    %47 = arith.mulf %46, %2 : vector<1x128xf32>
    %48 = arith.addf %44, %47 : vector<1x128xf32>
    %49 = arith.negf %48 : vector<1x128xf32>
    %50 = math.exp %49 : vector<1x128xf32>
    %cst_3 = arith.constant 1.000000e+00 : f32
    %51 = vector.broadcast %cst_3 : f32 to vector<1x128xf32>
    %52 = arith.addf %51, %50 : vector<1x128xf32>
    %53 = arith.divf %51, %52 : vector<1x128xf32>
    %c12 = arith.constant 12 : index
    %54 = memref.load %arg2[%c12] : memref<16xf32, #tpu.memory_space<smem>>
    %55 = vector.broadcast %54 : f32 to vector<1x128xf32>
    %56 = arith.mulf %55, %1 : vector<1x128xf32>
    %c13 = arith.constant 13 : index
    %57 = memref.load %arg2[%c13] : memref<16xf32, #tpu.memory_space<smem>>
    %58 = vector.broadcast %57 : f32 to vector<1x128xf32>
    %59 = arith.mulf %58, %2 : vector<1x128xf32>
    %60 = arith.addf %56, %59 : vector<1x128xf32>
    %61 = math.tanh %60 : vector<1x128xf32>
    %c14 = arith.constant 14 : index
    %62 = memref.load %arg2[%c14] : memref<16xf32, #tpu.memory_space<smem>>
    %63 = vector.broadcast %62 : f32 to vector<1x128xf32>
    %64 = arith.mulf %63, %1 : vector<1x128xf32>
    %c15 = arith.constant 15 : index
    %65 = memref.load %arg2[%c15] : memref<16xf32, #tpu.memory_space<smem>>
    %66 = vector.broadcast %65 : f32 to vector<1x128xf32>
    %67 = arith.mulf %66, %2 : vector<1x128xf32>
    %68 = arith.addf %64, %67 : vector<1x128xf32>
    %69 = arith.negf %68 : vector<1x128xf32>
    %70 = math.exp %69 : vector<1x128xf32>
    %cst_4 = arith.constant 1.000000e+00 : f32
    %71 = vector.broadcast %cst_4 : f32 to vector<1x128xf32>
    %72 = arith.addf %71, %70 : vector<1x128xf32>
    %73 = arith.divf %71, %72 : vector<1x128xf32>
    %74 = arith.mulf %53, %61 : vector<1x128xf32>
    %75 = math.tanh %74 : vector<1x128xf32>
    %76 = arith.mulf %73, %75 : vector<1x128xf32>
    %77 = tpu.iota {dimensions = array<i32: 0>} : vector<128x128xi32>
    %78 = vector.broadcast %4 : vector<1x128xi32> to vector<128x128xi32>
    %79 = arith.cmpi eq, %77, %78 : vector<128x128xi32>
    %c10_i32 = arith.constant 10 : i32
    %80 = vector.broadcast %c10_i32 : i32 to vector<1x128xi32>
    %81 = arith.addi %6, %80 : vector<1x128xi32>
    %82 = vector.broadcast %81 : vector<1x128xi32> to vector<128x128xi32>
    %83 = arith.cmpi eq, %77, %82 : vector<128x128xi32>
    %84 = arith.ori %79, %83 : vector<128x128xi1>
    %85 = arith.extui %84 : vector<128x128xi1> to vector<128x128xi32>
    %86 = arith.sitofp %85 : vector<128x128xi32> to vector<128x128xf32>
    %c0_5 = arith.constant 0 : index
    %c0_6 = arith.constant 0 : index
    %87 = vector.load %arg7[%c0_5, %c0_6] : memref<128x128xf32, #tpu.memory_space<vmem>>, vector<128x128xf32>
    tpu.vector_store %arg7[%c0_5, %c0_6], %86 {strides = array<i32>} : memref<128x128xf32, #tpu.memory_space<vmem>>, vector<128x128xf32>,
    %c120 = arith.constant 120 : index
    %c0_7 = arith.constant 0 : index
    %88 = vector.load %arg7[%c120, %c0_7] : memref<128x128xf32, #tpu.memory_space<vmem>>, vector<1x128xf32>
    tpu.vector_store %arg7[%c120, %c0_7], %41 {strides = array<i32>} : memref<128x128xf32, #tpu.memory_space<vmem>>, vector<1x128xf32>,
    %c121 = arith.constant 121 : index
    %c0_8 = arith.constant 0 : index
    %89 = vector.load %arg7[%c121, %c0_8] : memref<128x128xf32, #tpu.memory_space<vmem>>, vector<1x128xf32>
    tpu.vector_store %arg7[%c121, %c0_8], %76 {strides = array<i32>} : memref<128x128xf32, #tpu.memory_space<vmem>>, vector<1x128xf32>,
    %c122 = arith.constant 122 : index
    %c0_9 = arith.constant 0 : index
    %90 = vector.load %arg7[%c122, %c0_9] : memref<128x128xf32, #tpu.memory_space<vmem>>, vector<1x128xf32>
    tpu.vector_store %arg7[%c122, %c0_9], %39 {strides = array<i32>} : memref<128x128xf32, #tpu.memory_space<vmem>>, vector<1x128xf32>,
    %c123 = arith.constant 123 : index
    %c0_10 = arith.constant 0 : index
    %91 = vector.load %arg7[%c123, %c0_10] : memref<128x128xf32, #tpu.memory_space<vmem>>, vector<1x128xf32>
    tpu.vector_store %arg7[%c123, %c0_10], %74 {strides = array<i32>} : memref<128x128xf32, #tpu.memory_space<vmem>>, vector<1x128xf32>,
    %cst_11 = arith.constant 1.000000e+00 : f32
    %92 = vector.broadcast %cst_11 : f32 to vector<1x128xf32>
    %c124 = arith.constant 124 : index
    %c0_12 = arith.constant 0 : index
    %93 = vector.load %arg7[%c124, %c0_12] : memref<128x128xf32, #tpu.memory_space<vmem>>, vector<1x128xf32>
    tpu.vector_store %arg7[%c124, %c0_12], %92 {strides = array<i32>} : memref<128x128xf32, #tpu.memory_space<vmem>>, vector<1x128xf32>,
    %c0_13 = arith.constant 0 : index
    %c0_14 = arith.constant 0 : index
    %94 = vector.load %arg3[%c0_13, %c0_14] : memref<20x128xf32, #tpu.memory_space<vmem>>, vector<20x128xf32>
    %c0_15 = arith.constant 0 : index
    %c0_16 = arith.constant 0 : index
    %95 = vector.load %arg7[%c0_15, %c0_16] : memref<128x128xf32, #tpu.memory_space<vmem>>, vector<128x128xf32>
    %cst_17 = arith.constant dense<0.000000e+00> : vector<20x128xf32>
    %96 = tpu.matmul %94, %95, %cst_17 {dimension_numbers = #tpu.dot_dimension_numbers<[1], [0], [0], [1], [0, 0, 1, 1], [], []>} : vector<20x128xf32>, vector<128x128xf32>, vector<20x128xf32> -> vector<20x128xf32>
    %97 = math.tanh %96 : vector<20x128xf32>
    %c0_18 = arith.constant 0 : index
    %c0_19 = arith.constant 0 : index
    %98 = vector.load %arg4[%c0_18, %c0_19] : memref<1x20xf32, #tpu.memory_space<vmem>>, vector<1x20xf32>
    %cst_20 = arith.constant dense<0.000000e+00> : vector<1x128xf32>
    %99 = tpu.matmul %98, %97, %cst_20 {dimension_numbers = #tpu.dot_dimension_numbers<[1], [0], [0], [1], [0, 0, 1, 1], [], []>} : vector<1x20xf32>, vector<20x128xf32>, vector<1x128xf32> -> vector<1x128xf32>
    %c0_21 = arith.constant 0 : index
    %c0_22 = arith.constant 0 : index
    %100 = vector.load %arg5[%c0_21, %c0_22] : memref<1x1xf32, #tpu.memory_space<vmem>>, vector<1x1xf32>
    %101 = vector.broadcast %100 : vector<1x1xf32> to vector<1x128xf32>
    %102 = arith.addf %99, %101 : vector<1x128xf32>
    %103 = arith.negf %102 : vector<1x128xf32>
    %104 = math.exp %103 : vector<1x128xf32>
    %cst_23 = arith.constant 1.000000e+00 : f32
    %105 = vector.broadcast %cst_23 : f32 to vector<1x128xf32>
    %106 = arith.addf %105, %104 : vector<1x128xf32>
    %107 = arith.divf %105, %106 : vector<1x128xf32>
    %c0_24 = arith.constant 0 : index
    %c0_25 = arith.constant 0 : index
    %108 = vector.load %arg6[%c0_24, %c0_25] : memref<1x128xf32, #tpu.memory_space<vmem>>, vector<1x128xf32>
    tpu.vector_store %arg6[%c0_24, %c0_25], %107 {strides = array<i32>} : memref<1x128xf32, #tpu.memory_space<vmem>>, vector<1x128xf32>,
    return
  }
  func.func @transform_0(%arg0: i32) -> (i32, i32) {
    %c0_i32 = arith.constant 0 : i32
    %c0_i32_0 = arith.constant 0 : i32
    return %c0_i32, %arg0 : i32, i32
  }
  func.func @transform_1(%arg0: i32) -> i32 {
    %c0_i32 = arith.constant 0 : i32
    %c0_i32_0 = arith.constant 0 : i32
    return %c0_i32 : i32
  }
  func.func @transform_2(%arg0: i32) -> (i32, i32) {
    %c0_i32 = arith.constant 0 : i32
    %c0_i32_0 = arith.constant 0 : i32
    %c0_i32_1 = arith.constant 0 : i32
    return %c0_i32, %c0_i32_0 : i32, i32
  }
  func.func @transform_3(%arg0: i32) -> (i32, i32) {
    %c0_i32 = arith.constant 0 : i32
    %c0_i32_0 = arith.constant 0 : i32
    %c0_i32_1 = arith.constant 0 : i32
    return %c0_i32, %c0_i32_0 : i32, i32
  }
  func.func @transform_4(%arg0: i32) -> (i32, i32) {
    %c0_i32 = arith.constant 0 : i32
    %c0_i32_0 = arith.constant 0 : i32
    %c0_i32_1 = arith.constant 0 : i32
    return %c0_i32, %c0_i32_0 : i32, i32
  }
  func.func @transform_5(%arg0: i32) -> (i32, i32) {
    %c0_i32 = arith.constant 0 : i32
    %c0_i32_0 = arith.constant 0 : i32
    return %c0_i32, %arg0 : i32, i32
  }
}

</mosaic_0001>

<llo_original>
// kernel: tpu_custom_call.1
$region0: #{tpu_custom_call.1}
  #allocation0 [shape = 'u32[]', space=smem, size = 0x4, offset = 0x4, fixed_abs, tag = 'smem constant byte address 0x4 - core index']
  #allocation1 [shape = 'u32[144,128]{1,0:T(1,128)}', space=vmem, size = 0x12000, scoped, tag = 'internal scratch']
  #allocation2 [shape = 'f32[128,128]{1,0:T(8,128)}', space=vmem, size = 0x10000, scoped, tag = 'scratch operand']
  #allocation3 [shape = 'f32[1,1]{1,0:T(1,128)S(1)}', space=vmem, size = 0x200, scoped, tag = 'scoped memory for tpu_custom_call.1']
  %s0 = inlined_call_operand.hbm [shape: f32[4,128], index: 0, kind: input, shape index: {}]
  %s1 = inlined_call_operand.vmem [shape: f32[16], index: 1, kind: input, shape index: {}]
  %s2 = inlined_call_operand.hbm [shape: f32[20,128], index: 2, kind: input, shape index: {}]
  %s3 = inlined_call_operand.vmem [shape: f32[1,20], index: 3, kind: input, shape index: {}]
  %s4 = inlined_call_operand.<no memory space> [shape: f32[1,1], index: 4, kind: input, shape index: {}]
  %s5 = inlined_call_operand.hbm [shape: f32[1,128], index: 5, kind: output, shape index: {}]
  %s6 = sld [smem:[#allocation0]]
  $region42: #{tpu_custom_call.1} parent=0
    _
  %s8 = ssub.s32 1, %s6
  %s9 = scalar_select 0, %s8, %s6
  %v10 = vstv %s4
  %11 = vst [vmem:[#allocation3] sm:$0x1] %v10
  $region1: #{tpu_custom_call.1} parent=0
    #allocation4 [shape = 'u8[2048]{0}', space=vmem, size = 0x800, scoped, tag = 'input window, operand 0, single buffered']
    #allocation5 [shape = 's32[1]{0}', space=sflag, size = 0x4, scoped, tag = 'scoped memory for tpu_custom_call.1']
    #allocation6 [shape = 's32[1]{0}', space=sflag, size = 0x4, scoped, tag = 'scoped memory for tpu_custom_call.1']
    #allocation7 [shape = 's32[1]{0}', space=sflag, size = 0x4, scoped, tag = 'scoped memory for tpu_custom_call.1']
    #allocation8 [shape = 'u8[512]{0}', space=smem, size = 0x200, scoped, tag = 'input window, operand 1, single buffered']
    #allocation9 [shape = 'u8[12288]{0}', space=vmem, size = 0x3000, scoped, tag = 'input window, operand 2, single buffered']
    #allocation10 [shape = 's32[1]{0}', space=sflag, size = 0x4, scoped, tag = 'scoped memory for tpu_custom_call.1']
    #allocation11 [shape = 'u8[512]{0}', space=vmem, size = 0x400, scoped, tag = 'output window, operand 0, single buffered']
    %12 = vsyncpa [#allocation5], 0
    %13 = vsyncpa [#allocation7], 0
    %14 = vsyncpa [#allocation10], 0
    %15 = vsyncpa [#allocation6], 0
    // Predicated region
    $region2: #{tpu_custom_call.1} parent=1 // pred_check
      _
    $region3: #{tpu_custom_call.1} parent=1 // pred_check_branch
      %17 = sbr.rel (0) target = $region5
    $region4: #{tpu_custom_call.1} parent=1 // pred_region
      %s19 = ssub.s32 64, 64
      %20 = vsyncadd [#allocation5], %s19
      %s22 = sshll.u32 [#allocation4], 4
      %s23 = int_to_ptr.vmem [resolvable:$true] %s22
      %25 = dma.hbm_to_vmem [thread:$0]  %s0, 64, %s23, [#allocation5]
    $region5: #{tpu_custom_call.1} parent=1 // pred_fallthru
      _
    // Predicated region
    $region6: #{tpu_custom_call.1} parent=1 // pred_check
      _
    $region7: #{tpu_custom_call.1} parent=1 // pred_check_branch
      %27 = sbr.rel (0) target = $region9
    $region8: #{tpu_custom_call.1} parent=1 // pred_region
      %s29 = ssub.s32 16, 16
      %30 = vsyncadd [#allocation7], %s29
      %s32 = sshll.u32 %s1, 4
      %s33 = int_to_ptr.vmem [resolvable:$true] %s32
      %35 = dma.vmem_to_smem %s33, 16, [#allocation8], [#allocation7]
    $region9: #{tpu_custom_call.1} parent=1 // pred_fallthru
      _
    // Predicated region
    $region10: #{tpu_custom_call.1} parent=1 // pred_check
      _
    $region11: #{tpu_custom_call.1} parent=1 // pred_check_branch
      %37 = sbr.rel (0) target = $region13
    $region12: #{tpu_custom_call.1} parent=1 // pred_region
      %s39 = ssub.s32 384, 384
      %40 = vsyncadd [#allocation10], %s39
      %s41 = sshll.u32 [#allocation9], 4
      %s42 = int_to_ptr.vmem [resolvable:$true] %s41
      %47 = dma.hbm_to_vmem [thread:$0]  %s2, 384, %s42, [#allocation10], 128, 128, 8
    $region13: #{tpu_custom_call.1} parent=1 // pred_fallthru
      _
    // Predicated region
    $region14: #{tpu_custom_call.1} parent=1 // pred_check
      _
    $region15: #{tpu_custom_call.1} parent=1 // pred_check_branch
      %49 = sbr.rel (0) target = $region17
    $region16: #{tpu_custom_call.1} parent=1 // pred_region
      _
    $region17: #{tpu_custom_call.1} parent=1 // pred_fallthru
      _
    // Predicated region
    $region18: #{tpu_custom_call.1} parent=1 // pred_check
      _
    $region19: #{tpu_custom_call.1} parent=1 // pred_check_branch
      %51 = sbr.rel (0) target = $region21
    $region20: #{tpu_custom_call.1} parent=1 // pred_region
      _
    $region21: #{tpu_custom_call.1} parent=1 // pred_fallthru
      _
    // Predicated region
    $region22: #{tpu_custom_call.1} parent=1 // pred_check
      _
    $region23: #{tpu_custom_call.1} parent=1 // pred_check_branch
      %53 = sbr.rel (0) target = $region25
    $region24: #{tpu_custom_call.1} parent=1 // pred_region
      %54 = dma.done [#allocation5], 64
    $region25: #{tpu_custom_call.1} parent=1 // pred_fallthru
      _
    // Predicated region
    $region26: #{tpu_custom_call.1} parent=1 // pred_check
      _
    $region27: #{tpu_custom_call.1} parent=1 // pred_check_branch
      %56 = sbr.rel (0) target = $region29
    $region28: #{tpu_custom_call.1} parent=1 // pred_region
      %57 = dma.done [#allocation7], 16
    $region29: #{tpu_custom_call.1} parent=1 // pred_fallthru
      _
    // Predicated region
    $region30: #{tpu_custom_call.1} parent=1 // pred_check
      _
    $region31: #{tpu_custom_call.1} parent=1 // pred_check_branch
      %59 = sbr.rel (0) target = $region33
    $region32: #{tpu_custom_call.1} parent=1 // pred_region
      %60 = dma.done [#allocation10], 384
    $region33: #{tpu_custom_call.1} parent=1 // pred_fallthru
      _
    %61 = sfence
    %v62 = vld [vmem:[#allocation4] sm:$0xf]
    %s64 = sld [smem:[#allocation8]]
    %v65 = vstv %s64
    %v66 = vmul.f32 %v65, %v62
    %s67 = sld [smem:[#allocation8 + $0x1]]
    %v68 = vstv %s67
    %v69 = vmul.f32 %v68, %v62
    %v71 = vrot.slane %v69, 1
    %v73 = vadd.f32 %v66, %v71
    %v74 = vxor.u32 %v73, 2147483648
    %v75 = vmul.f32 %v74, 1.442695
    %v76 = vpow.pop %v75
    %v77 = vadd.f32 %v76, 1.0
    %v78 = vrcp.pop %v77
    %v79 = vmul.f32 1.0, %v78
    %s80 = sld [smem:[#allocation8 + $0x4]]
    %v81 = vstv %s80
    %v82 = vmul.f32 %v81, %v62
    %s83 = sld [smem:[#allocation8 + $0x5]]
    %v84 = vstv %s83
    %v85 = vmul.f32 %v84, %v62
    %v87 = vrot.slane %v85, 1
    %v89 = vadd.f32 %v82, %v87
    %v90 = vtanh.pop %v89
    %s91 = sld [smem:[#allocation8 + $0x6]]
    %v92 = vstv %s91
    %v93 = vmul.f32 %v92, %v62
    %s94 = sld [smem:[#allocation8 + $0x7]]
    %v95 = vstv %s94
    %v96 = vmul.f32 %v95, %v62
    %v98 = vrot.slane %v96, 1
    %v100 = vadd.f32 %v93, %v98
    %v101 = vxor.u32 %v100, 2147483648
    %v102 = vmul.f32 %v101, 1.442695
    %v103 = vpow.pop %v102
    %v104 = vadd.f32 %v103, 1.0
    %v105 = vrcp.pop %v104
    %v106 = vmul.f32 1.0, %v105
    %v107 = vmul.f32 %v79, %v90
    %v108 = vtanh.pop %v107
    %v109 = vmul.f32 %v106, %v108
    %s110 = sld [smem:[#allocation8 + $0x8]]
    %v111 = vstv %s110
    %v112 = vmul.f32 %v111, %v62
    %s113 = sld [smem:[#allocation8 + $0x9]]
    %v114 = vstv %s113
    %v115 = vmul.f32 %v114, %v62
    %v117 = vrot.slane %v115, 1
    %v119 = vadd.f32 %v112, %v117
    %v120 = vxor.u32 %v119, 2147483648
    %v121 = vmul.f32 %v120, 1.442695
    %v122 = vpow.pop %v121
    %v123 = vadd.f32 %v122, 1.0
    %v124 = vrcp.pop %v123
    %v125 = vmul.f32 1.0, %v124
    %s126 = sld [smem:[#allocation8 + $0xc]]
    %v127 = vstv %s126
    %v128 = vmul.f32 %v127, %v62
    %s129 = sld [smem:[#allocation8 + $0xd]]
    %v130 = vstv %s129
    %v131 = vmul.f32 %v130, %v62
    %v133 = vrot.slane %v131, 1
    %v135 = vadd.f32 %v128, %v133
    %v136 = vtanh.pop %v135
    %s137 = sld [smem:[#allocation8 + $0xe]]
    %v138 = vstv %s137
    %v139 = vmul.f32 %v138, %v62
    %s140 = sld [smem:[#allocation8 + $0xf]]
    %v141 = vstv %s140
    %v142 = vmul.f32 %v141, %v62
    %v144 = vrot.slane %v142, 1
    %v146 = vadd.f32 %v139, %v144
    %v147 = vxor.u32 %v146, 2147483648
    %v148 = vmul.f32 %v147, 1.442695
    %v149 = vpow.pop %v148
    %v150 = vadd.f32 %v149, 1.0
    %v151 = vrcp.pop %v150
    %v152 = vmul.f32 1.0, %v151
    %v153 = vmul.f32 %v125, %v136
    %v154 = vtanh.pop %v153
    %v155 = vmul.f32 %v152, %v154
    %v156 = vlaneseq
    %v157 = vshrl.u32 %v156, 7
    %v158 = vadd.s32 %v157, 8
    %v159 = vadd.s32 %v157, 16
    %v160 = vadd.s32 %v157, 24
    %v161 = vadd.s32 %v157, 32
    %v162 = vadd.s32 %v157, 40
    %v163 = vadd.s32 %v157, 48
    %v164 = vadd.s32 %v157, 56
    %v165 = vadd.s32 %v157, 64
    %v166 = vadd.s32 %v157, 72
    %v167 = vadd.s32 %v157, 80
    %v168 = vadd.s32 %v157, 88
    %v169 = vadd.s32 %v157, 96
    %v170 = vadd.s32 %v157, 104
    %v171 = vadd.s32 %v157, 112
    %v172 = vadd.s32 %v157, 120
    %v173 = vlaneseq
    %v174 = vshrl.u32 %v173, 7
    %v175 = vsub.s32 2, %v174
    %v176 = vrot.slane %v62, %v175
    %vm177 = vcmp.eq.s32.totalorder %v157, %v176
    %vm178 = vcmp.eq.s32.totalorder %v158, %v176
    %vm179 = vcmp.eq.s32.totalorder %v159, %v176
    %vm180 = vcmp.eq.s32.totalorder %v160, %v176
    %vm181 = vcmp.eq.s32.totalorder %v161, %v176
    %vm182 = vcmp.eq.s32.totalorder %v162, %v176
    %vm183 = vcmp.eq.s32.totalorder %v163, %v176
    %vm184 = vcmp.eq.s32.totalorder %v164, %v176
    %vm185 = vcmp.eq.s32.totalorder %v165, %v176
    %vm186 = vcmp.eq.s32.totalorder %v166, %v176
    %vm187 = vcmp.eq.s32.totalorder %v167, %v176
    %vm188 = vcmp.eq.s32.totalorder %v168, %v176
    %vm189 = vcmp.eq.s32.totalorder %v169, %v176
    %vm190 = vcmp.eq.s32.totalorder %v170, %v176
    %vm191 = vcmp.eq.s32.totalorder %v171, %v176
    %vm192 = vcmp.eq.s32.totalorder %v172, %v176
    %v193 = vadd.s32 %v62, 10
    %v194 = vlaneseq
    %v195 = vshrl.u32 %v194, 7
    %v196 = vsub.s32 3, %v195
    %v197 = vrot.slane %v193, %v196
    %vm198 = vcmp.eq.s32.totalorder %v157, %v197
    %vm199 = vcmp.eq.s32.totalorder %v158, %v197
    %vm200 = vcmp.eq.s32.totalorder %v159, %v197
    %vm201 = vcmp.eq.s32.totalorder %v160, %v197
    %vm202 = vcmp.eq.s32.totalorder %v161, %v197
    %vm203 = vcmp.eq.s32.totalorder %v162, %v197
    %vm204 = vcmp.eq.s32.totalorder %v163, %v197
    %vm205 = vcmp.eq.s32.totalorder %v164, %v197
    %vm206 = vcmp.eq.s32.totalorder %v165, %v197
    %vm207 = vcmp.eq.s32.totalorder %v166, %v197
    %vm208 = vcmp.eq.s32.totalorder %v167, %v197
    %vm209 = vcmp.eq.s32.totalorder %v168, %v197
    %vm210 = vcmp.eq.s32.totalorder %v169, %v197
    %vm211 = vcmp.eq.s32.totalorder %v170, %v197
    %vm212 = vcmp.eq.s32.totalorder %v171, %v197
    %vm213 = vcmp.eq.s32.totalorder %v172, %v197
    %vm214 = vmor %vm177, %vm198
    %vm215 = vmor %vm178, %vm199
    %vm216 = vmor %vm179, %vm200
    %vm217 = vmor %vm180, %vm201
    %vm218 = vmor %vm181, %vm202
    %vm219 = vmor %vm182, %vm203
    %vm220 = vmor %vm183, %vm204
    %vm221 = vmor %vm184, %vm205
    %vm222 = vmor %vm185, %vm206
    %vm223 = vmor %vm186, %vm207
    %vm224 = vmor %vm187, %vm208
    %vm225 = vmor %vm188, %vm209
    %vm226 = vmor %vm189, %vm210
    %vm227 = vmor %vm190, %vm211
    %vm228 = vmor %vm191, %vm212
    %vm229 = vmor %vm192, %vm213
    %v230 = vsel %vm214, 1, 0
    %v231 = vsel %vm215, 1, 0
    %v232 = vsel %vm216, 1, 0
    %v233 = vsel %vm217, 1, 0
    %v234 = vsel %vm218, 1, 0
    %v235 = vsel %vm219, 1, 0
    %v236 = vsel %vm220, 1, 0
    %v237 = vsel %vm221, 1, 0
    %v238 = vsel %vm222, 1, 0
    %v239 = vsel %vm223, 1, 0
    %v240 = vsel %vm224, 1, 0
    %v241 = vsel %vm225, 1, 0
    %v242 = vsel %vm226, 1, 0
    %v243 = vsel %vm227, 1, 0
    %v244 = vsel %vm228, 1, 0
    %v245 = vsel %vm229, 1, 0
    %v246 = vcvt.s32.f32 %v230
    %v247 = vcvt.s32.f32 %v231
    %v248 = vcvt.s32.f32 %v232
    %v249 = vcvt.s32.f32 %v233
    %v250 = vcvt.s32.f32 %v234
    %v251 = vcvt.s32.f32 %v235
    %v252 = vcvt.s32.f32 %v236
    %v253 = vcvt.s32.f32 %v237
    %v254 = vcvt.s32.f32 %v238
    %v255 = vcvt.s32.f32 %v239
    %v256 = vcvt.s32.f32 %v240
    %v257 = vcvt.s32.f32 %v241
    %v258 = vcvt.s32.f32 %v242
    %v259 = vcvt.s32.f32 %v243
    %v260 = vcvt.s32.f32 %v244
    %v261 = vcvt.s32.f32 %v245
    %262 = vst [vmem:[#allocation2] sm:$0xff] %v246
    %263 = vst [vmem:[#allocation2 + $0x8] sm:$0xff] %v247
    %264 = vst [vmem:[#allocation2 + $0x10] sm:$0xff] %v248
    %265 = vst [vmem:[#allocation2 + $0x18] sm:$0xff] %v249
    %266 = vst [vmem:[#allocation2 + $0x20] sm:$0xff] %v250
    %267 = vst [vmem:[#allocation2 + $0x28] sm:$0xff] %v251
    %268 = vst [vmem:[#allocation2 + $0x30] sm:$0xff] %v252
    %269 = vst [vmem:[#allocation2 + $0x38] sm:$0xff] %v253
    %270 = vst [vmem:[#allocation2 + $0x40] sm:$0xff] %v254
    %271 = vst [vmem:[#allocation2 + $0x48] sm:$0xff] %v255
    %272 = vst [vmem:[#allocation2 + $0x50] sm:$0xff] %v256
    %273 = vst [vmem:[#allocation2 + $0x58] sm:$0xff] %v257
    %274 = vst [vmem:[#allocation2 + $0x60] sm:$0xff] %v258
    %275 = vst [vmem:[#allocation2 + $0x68] sm:$0xff] %v259
    %276 = vst [vmem:[#allocation2 + $0x70] sm:$0xff] %v260
    %277 = vst [vmem:[#allocation2 + $0x78] sm:$0xff] %v261
    %278 = vst [vmem:[#allocation2 + $0x78] sm:$0x1] %v109
    %279 = vst [vmem:[#allocation2 + $0x79] sm:$0x1] %v155
    %280 = vst [vmem:[#allocation2 + $0x7a] sm:$0x1] %v107
    %281 = vst [vmem:[#allocation2 + $0x7b] sm:$0x1] %v153
    %282 = vst [vmem:[#allocation2 + $0x7c] sm:$0x1] 1.0
    %v283 = vld [vmem:[#allocation9] sm:$0xff]
    %v284 = vld [vmem:[#allocation9 + $0x8] sm:$0xff]
    %v285 = vld [vmem:[#allocation9 + $0x10] sm:$0xf]
    %v286 = vld [vmem:[#allocation2] sm:$0xff]
    %v287 = vld [vmem:[#allocation2 + $0x8] sm:$0xff]
    %v288 = vld [vmem:[#allocation2 + $0x10] sm:$0xff]
    %v289 = vld [vmem:[#allocation2 + $0x18] sm:$0xff]
    %v290 = vld [vmem:[#allocation2 + $0x20] sm:$0xff]
    %v291 = vld [vmem:[#allocation2 + $0x28] sm:$0xff]
    %v292 = vld [vmem:[#allocation2 + $0x30] sm:$0xff]
    %v293 = vld [vmem:[#allocation2 + $0x38] sm:$0xff]
    %v294 = vld [vmem:[#allocation2 + $0x40] sm:$0xff]
    %v295 = vld [vmem:[#allocation2 + $0x48] sm:$0xff]
    %v296 = vld [vmem:[#allocation2 + $0x50] sm:$0xff]
    %v297 = vld [vmem:[#allocation2 + $0x58] sm:$0xff]
    %v298 = vld [vmem:[#allocation2 + $0x60] sm:$0xff]
    %v299 = vld [vmem:[#allocation2 + $0x68] sm:$0xff]
    %v300 = vld [vmem:[#allocation2 + $0x70] sm:$0xff]
    %v301 = vld [vmem:[#allocation2 + $0x78] sm:$0xff]
    %302 = vmatprep.subr.mxu0 0.0
    %303 = vmatpush1.msra.mxu0 %v286
    %304 = vmatprep.subr.mxu0 0.0
    %305 = vmatpush1.msra.mxu0 %v287
    %306 = vmatprep.subr.mxu0 0.0
    %307 = vmatpush1.msra.mxu0 %v288
    %308 = vmatprep.subr.mxu0 0.0
    %309 = vmatpush1.msra.mxu0 %v289
    %310 = vmatprep.subr.mxu0 0.0
    %311 = vmatpush1.msra.mxu0 %v290
    %312 = vmatprep.subr.mxu0 0.0
    %313 = vmatpush1.msra.mxu0 %v291
    %314 = vmatprep.subr.mxu0 0.0
    %315 = vmatpush1.msra.mxu0 %v292
    %316 = vmatprep.subr.mxu0 0.0
    %317 = vmatpush1.msra.mxu0 %v293
    %318 = vmatprep.subr.mxu0 0.0
    %319 = vmatpush1.msra.mxu0 %v294
    %320 = vmatprep.subr.mxu0 0.0
    %321 = vmatpush1.msra.mxu0 %v295
    %322 = vmatprep.subr.mxu0 0.0
    %323 = vmatpush1.msra.mxu0 %v296
    %324 = vmatprep.subr.mxu0 0.0
    %325 = vmatpush1.msra.mxu0 %v297
    %326 = vmatprep.subr.mxu0 0.0
    %327 = vmatpush1.msra.mxu0 %v298
    %328 = vmatprep.subr.mxu0 0.0
    %329 = vmatpush1.msra.mxu0 %v299
    %330 = vmatprep.subr.mxu0 0.0
    %331 = vmatpush1.msra.mxu0 %v300
    %332 = vmatprep.subr.mxu0 0.0
    %333 = vmatpush1.msra.mxu0 %v301
    %334 = vmatprep.subr.mxu0 0.0
    %335 = vmatpush1.msra.mxu0 0.0
    %336 = vmatprep.subr.mxu0 0.0
    %337 = vmatpush1.msra.mxu0 0.0
    %338 = vmatprep.subr.mxu0 0.0
    %339 = vmatpush1.msra.mxu0 0.0
    %340 = vmatprep.subr.mxu0 0.0
    %341 = vmatpush1.msra.mxu0 0.0
    %342 = vmatprep.subr.mxu0 0.0
    %343 = vmatpush1.msra.mxu0 0.0
    %344 = vmatprep.subr.mxu0 0.0
    %345 = vmatpush1.msra.mxu0 0.0
    %346 = vmatprep.subr.mxu0 0.0
    %347 = vmatpush1.msra.mxu0 0.0
    %348 = vmatprep.subr.mxu0 0.0
    %349 = vmatpush1.msra.mxu0 0.0
    %350 = vmatprep.subr.mxu0 0.0
    %351 = vmatpush1.msra.mxu0 0.0
    %352 = vmatprep.subr.mxu0 0.0
    %353 = vmatpush1.msra.mxu0 0.0
    %354 = vmatprep.subr.mxu0 0.0
    %355 = vmatpush1.msra.mxu0 0.0
    %356 = vmatprep.subr.mxu0 0.0
    %357 = vmatpush1.msra.mxu0 0.0
    %358 = vmatprep.subr.mxu0 0.0
    %359 = vmatpush1.msra.mxu0 0.0
    %360 = vmatprep.subr.mxu0 0.0
    %361 = vmatpush1.msra.mxu0 0.0
    %362 = vmatprep.subr.mxu0 0.0
    %363 = vmatpush1.msra.mxu0 0.0
    %364 = vmatprep.subr.mxu0 0.0
    %365 = vmatpush1.msra.mxu0 0.0
    %366 = vmatprep.mubr.f32.mxu0 0.0
    %367 = vmatmul.mubr.f32.gmra.mrb[0].mxu0 %v283
    %v368 = vpop.f32.mrb[0].mxu0
    %v369 = vadd.f32 0.0, %v368
    %v370 = vpop.f32.mrb[0].mxu0
    %371 = vmatprep.mubr.f32.mxu0 0.0
    %372 = vmatmul.mubr.f32.gmra.mrb[0].mxu0 %v284
    %v373 = vpop.f32.mrb[0].mxu0
    %v374 = vadd.f32 0.0, %v373
    %v375 = vpop.f32.mrb[0].mxu0
    %376 = vmatprep.mubr.f32.mxu0 0.0
    %377 = vmatmul.mubr.f32.gmra.mrb[0].mxu0 %v285
    %v378 = vpop.f32.mrb[0].mxu0
    %v379 = vadd.f32 0.0, %v378
    %v380 = vpop.f32.mrb[0].mxu0
    %381 = vdwg.mxu0
    %v382 = vtanh.pop %v369
    %v383 = vtanh.pop %v374
    %v384 = vtanh.pop %v379
    %v385 = vld [vmem:[%s3] sm:$0x1]
    %v386 = vld [vmem:[#allocation3] sm:$0x1]
    %388 = vset.pattern.permute.xlu0 0
    %389 = vperm.xlu0 %388, %v386
    %v390 = vpop.permute.xlu0 %389
    %v392 = vlaneseq
    %v393 = vshrl.u32 %v392, 7
    %v394 = vsub.s32 0, %v393
    %v395 = vrot.slane %v390, %v394
    %vm396 = vcmask 162816
    %v398 = vsel %vm396, %v385, 0
    %vm400 = vcmask 1043456
    %v402 = vsel %vm400, %v384, 0
    %404 = vmatprep.subr.mxu0 0.0
    %405 = vmatpush1.msra.mxu0 %v382
    %406 = vmatprep.subr.mxu0 0.0
    %407 = vmatpush1.msra.mxu0 %v383
    %408 = vmatprep.subr.mxu0 0.0
    %409 = vmatpush1.msra.mxu0 %v402
    %410 = vmatprep.subr.mxu0 0.0
    %411 = vmatpush1.msra.mxu0 0.0
    %412 = vmatprep.subr.mxu0 0.0
    %413 = vmatpush1.msra.mxu0 0.0
    %414 = vmatprep.subr.mxu0 0.0
    %415 = vmatpush1.msra.mxu0 0.0
    %416 = vmatprep.subr.mxu0 0.0
    %417 = vmatpush1.msra.mxu0 0.0
    %418 = vmatprep.subr.mxu0 0.0
    %419 = vmatpush1.msra.mxu0 0.0
    %420 = vmatprep.subr.mxu0 0.0
    %421 = vmatpush1.msra.mxu0 0.0
    %422 = vmatprep.subr.mxu0 0.0
    %423 = vmatpush1.msra.mxu0 0.0
    %424 = vmatprep.subr.mxu0 0.0
    %425 = vmatpush1.msra.mxu0 0.0
    %426 = vmatprep.subr.mxu0 0.0
    %427 = vmatpush1.msra.mxu0 0.0
    %428 = vmatprep.subr.mxu0 0.0
    %429 = vmatpush1.msra.mxu0 0.0
    %430 = vmatprep.subr.mxu0 0.0
    %431 = vmatpush1.msra.mxu0 0.0
    %432 = vmatprep.subr.mxu0 0.0
    %433 = vmatpush1.msra.mxu0 0.0
    %434 = vmatprep.subr.mxu0 0.0
    %435 = vmatpush1.msra.mxu0 0.0
    %436 = vmatprep.subr.mxu0 0.0
    %437 = vmatpush1.msra.mxu0 0.0
    %438 = vmatprep.subr.mxu0 0.0
    %439 = vmatpush1.msra.mxu0 0.0
    %440 = vmatprep.subr.mxu0 0.0
    %441 = vmatpush1.msra.mxu0 0.0
    %442 = vmatprep.subr.mxu0 0.0
    %443 = vmatpush1.msra.mxu0 0.0
    %444 = vmatprep.subr.mxu0 0.0
    %445 = vmatpush1.msra.mxu0 0.0
    %446 = vmatprep.subr.mxu0 0.0
    %447 = vmatpush1.msra.mxu0 0.0
    %448 = vmatprep.subr.mxu0 0.0
    %449 = vmatpush1.msra.mxu0 0.0
    %450 = vmatprep.subr.mxu0 0.0
    %451 = vmatpush1.msra.mxu0 0.0
    %452 = vmatprep.subr.mxu0 0.0
    %453 = vmatpush1.msra.mxu0 0.0
    %454 = vmatprep.subr.mxu0 0.0
    %455 = vmatpush1.msra.mxu0 0.0
    %456 = vmatprep.subr.mxu0 0.0
    %457 = vmatpush1.msra.mxu0 0.0
    %458 = vmatprep.subr.mxu0 0.0
    %459 = vmatpush1.msra.mxu0 0.0
    %460 = vmatprep.subr.mxu0 0.0
    %461 = vmatpush1.msra.mxu0 0.0
    %462 = vmatprep.subr.mxu0 0.0
    %463 = vmatpush1.msra.mxu0 0.0
    %464 = vmatprep.subr.mxu0 0.0
    %465 = vmatpush1.msra.mxu0 0.0
    %466 = vmatprep.subr.mxu0 0.0
    %467 = vmatpush1.msra.mxu0 0.0
    %468 = vmatprep.mubr.f32.mxu0 0.0
    %469 = vmatmul.mubr.f32.gmra.mrb[0].mxu0 %v398
    %v470 = vpop.f32.mrb[0].mxu0
    %v471 = vadd.f32 %v395, %v470
    %v472 = vpop.f32.mrb[0].mxu0
    %473 = vdwg.mxu0
    %v474 = vxor.u32 %v471, 2147483648
    %v475 = vmul.f32 %v474, 1.442695
    %v476 = vpow.pop %v475
    %v477 = vadd.f32 %v476, 1.0
    %v478 = vrcp.pop %v477
    %v479 = vmul.f32 1.0, %v478
    %480 = vst [vmem:[#allocation11] sm:$0x1] %v479
    // Predicated region
    $region34: #{tpu_custom_call.1} parent=1 // pred_check
      _
    $region35: #{tpu_custom_call.1} parent=1 // pred_check_branch
      %482 = sbr.rel (0) target = $region37
    $region36: #{tpu_custom_call.1} parent=1 // pred_region
      %s484 = ssub.s32 16, 16
      %485 = vsyncadd [#allocation6], %s484
      %s487 = sshll.u32 [#allocation11], 4
      %s488 = int_to_ptr.vmem [resolvable:$true] %s487
      %490 = dma.vmem_to_hbm [thread:$0]  %s488, 16, %s5, [#allocation6]
    $region37: #{tpu_custom_call.1} parent=1 // pred_fallthru
      _
    // Predicated region
    $region38: #{tpu_custom_call.1} parent=1 // pred_check
      _
    $region39: #{tpu_custom_call.1} parent=1 // pred_check_branch
      %492 = sbr.rel (0) target = $region41
    $region40: #{tpu_custom_call.1} parent=1 // pred_region
      %493 = dma.done [#allocation6], 16
    $region41: #{tpu_custom_call.1} parent=1 // pred_fallthru
      _
    %494 = vsyncpa [#allocation5], 1
    %495 = vsyncpa [#allocation10], 1
    %496 = vsyncpa [#allocation6], 1
    %497 = vsyncpa [#allocation7], 1

</llo_original>
